<compile_context>
chip_gen: v7x
topology: tpu7x:2x2x1
jax: 0.10.0
libtpu: 0.0.40
codegen_flags: <defaults>
</compile_context>

<pallas_src>
import functools

import jax
import jax.numpy as jnp
from jax.experimental import pallas as pl
from jax.experimental.pallas import tpu as pltpu


# ----------------------------- synthetic polynomial spec ---------------------
U = 128                      # operand_extent (uniform 1d segment extent)
NUM_SEG = (4, 3, 5)          # segments for (input0, input1, output)


def _make_paths():
    paths, coeffs = [], []
    s0, s1, so = NUM_SEG
    for i0 in range(s0):
        for i1 in range(s1):
            io = (i0 + i1) % so
            paths.append((i0, i1, io))
            coeffs.append(0.1 * (i0 + 1) * (i1 + 2) * ((-1.0) ** (i0 + i1)))
    return tuple(paths), tuple(coeffs)


PATHS, COEFFS = _make_paths()


def _round_up(x, m):
    return ((x + m - 1) // m) * m


# --------------------------------- Pallas kernel -----------------------------
def _stp_uniform1d_kernel(x0_ref, x1_ref, o_ref, *, u, num_out_seg, paths,
                          coeffs, math_dtype):
    """One batch-tile of the segmented tensor product (paths fully unrolled).

    Reads/writes are per 128-lane segment (static, lane-aligned slices) so
    only one (tb, u) accumulator plus the currently-needed input segments are
    live; no full-tile load and no concatenate-materialized VMEM copy.
    """
    tb = o_ref.shape[0]

    # Group paths by output segment, then by input-0 segment so the x0 segment
    # (and its weighted x1 combination) is reused across paths sharing it.
    by_out = {}
    for (i0, i1, io), c in zip(paths, coeffs):
        by_out.setdefault(io, {}).setdefault(i0, []).append((i1, c))

    for io in range(num_out_seg):
        acc = None
        for i0, terms in sorted(by_out.get(io, {}).items()):
            x0_seg = x0_ref[:, i0 * u:(i0 + 1) * u].astype(math_dtype)
            inner = None
            for i1, c in terms:
                x1_seg = x1_ref[:, i1 * u:(i1 + 1) * u].astype(math_dtype)
                t = jnp.asarray(c, math_dtype) * x1_seg
                inner = t if inner is None else inner + t
            contrib = x0_seg * inner
            acc = contrib if acc is None else acc + contrib
        if acc is None:
            acc = jnp.zeros((tb, u), math_dtype)
        # direct, 128-lane-aligned unmasked store of this output segment
        o_ref[:, io * u:(io + 1) * u] = acc.astype(o_ref.dtype)


# --------------------------------- module wrapper ----------------------------
class SegmentedPolynomialFromUniform1dPallas:
    """Pallas analogue of SegmentedPolynomialFromUniform1dJit (forward only)."""

    def __init__(self, operand_extent=U, buffer_num_segments=NUM_SEG,
                 paths=PATHS, coeffs=COEFFS, math_dtype=jnp.float32,
                 batch_tile=1024, name="segmented_polynomial"):
        self.u = operand_extent
        self.buffer_num_segments = buffer_num_segments
        self.paths = paths
        self.coeffs = coeffs
        self.math_dtype = math_dtype
        self.batch_tile = batch_tile          # tunable; mem-bound => big tiles
        self.name = name
        self.num_inputs = 2
        self.num_outputs = 1
        # mirrors the reference module's flattened path tables
        self.path_indices = [i for p in paths for i in p]
        self.path_coefficients = list(coeffs)

    def _pick_tile(self, b, dtype):
        """Large batch tile, dtype-aligned sublanes, >= ~4 grid steps."""
        itemsize = jnp.dtype(dtype).itemsize
        align = {4: 8, 2: 16, 1: 32}.get(itemsize, 8)   # (8,128)/(16,128)/(32,128)
        tb = min(self.batch_tile, max(align, _round_up(pl.cdiv(b, 4), align)))
        return _round_up(tb, align)

    def __call__(self, inputs, input_indices=None, output_shapes=None,
                 output_indices=None):
        # TODO(synk): BATCH_DIM_INDEXED / BATCH_DIM_SHARED (gather via
        # input_indices, scatter via output_indices) and 0-dim operand buffers
        # are not implemented; only the plain BATCH_DIM_BATCHED path is covered.
        assert not input_indices and not output_indices, \
            "indexed batch dims not supported in this Pallas port"

        x0, x1 = inputs
        b = x0.shape[0]
        s0, s1, so = self.buffer_num_segments
        u = self.u
        assert x0.shape == (b, s0 * u) and x1.shape == (b, s1 * u)

        tb = self._pick_tile(b, x0.dtype)
        b_pad = _round_up(b, tb)
        if b_pad != b:
            pad = b_pad - b
            x0 = jnp.pad(x0, ((0, pad), (0, 0)))
            x1 = jnp.pad(x1, ((0, pad), (0, 0)))
        grid = (b_pad // tb,)

        itemsize = jnp.dtype(x0.dtype).itemsize
        # double-buffered in/out tiles + f32 accumulator + compiler headroom,
        # floored at the 32 MiB default, capped well under v7x's 64 MiB VMEM.
        tile_bytes = tb * (s0 + s1 + so) * u * itemsize
        vmem_limit = int(min(48 << 20,
                             max(32 << 20, 2 * tile_bytes + tb * u * 4 + (8 << 20))))

        cost = pl.CostEstimate(
            flops=3 * len(self.paths) * u * b_pad,           # 2 mul + 1 add / path
            transcendentals=0,
            bytes_accessed=b_pad * (s0 + s1 + so) * u * itemsize)

        kernel = functools.partial(
            _stp_uniform1d_kernel,
            u=u, num_out_seg=so, paths=self.paths, coeffs=self.coeffs,
            math_dtype=self.math_dtype)

        out = pl.pallas_call(
            kernel,
            out_shape=jax.ShapeDtypeStruct((b_pad, so * u), x0.dtype),
            grid_spec=pltpu.PrefetchScalarGridSpec(
                num_scalar_prefetch=0,
                grid=grid,
                in_specs=[
                    pl.BlockSpec((tb, s0 * u), lambda i: (i, 0)),
                    pl.BlockSpec((tb, s1 * u), lambda i: (i, 0)),
                ],
                out_specs=pl.BlockSpec((tb, so * u), lambda i: (i, 0)),
            ),
            compiler_params=pltpu.CompilerParams(
                dimension_semantics=("parallel",),
                vmem_limit_bytes=vmem_limit),
            cost_estimate=cost,
        )(x0, x1)

        if b_pad != b:
            out = out[:b]
        return [out]


# --------------------------------- reference ---------------------------------
def _reference_forward(x0, x1):
    s0, s1, so = NUM_SEG
    out = jnp.zeros((x0.shape[0], so * U), jnp.float32)
    x0 = x0.astype(jnp.float32)
    x1 = x1.astype(jnp.float32)
    for (i0, i1, io), c in zip(PATHS, COEFFS):
        out = out.at[:, io * U:(io + 1) * U].add(
            c * x0[:, i0 * U:(i0 + 1) * U] * x1[:, i1 * U:(i1 + 1) * U])
    return out


# ------------------------------------ main ------------------------------------
if __name__ == "__main__":
    key = jax.random.PRNGKey(0)
    k0, k1 = jax.random.split(key)

    B = 16
    s0, s1, so = NUM_SEG
    x0 = jax.random.normal(k0, (B, s0 * U), dtype=jnp.float32)
    x1 = jax.random.normal(k1, (B, s1 * U), dtype=jnp.float32)

    module = SegmentedPolynomialFromUniform1dPallas()
    (out,) = module([x0, x1], input_indices={}, output_shapes={}, output_indices={})
    out = jax.block_until_ready(out)

    ref = _reference_forward(x0, x1)
    assert out.shape == (B, so * U) and out.dtype == x0.dtype
    assert jnp.allclose(out, ref, atol=1e-5, rtol=1e-5), "mismatch vs reference"

    # also exercise a batch that does not divide the tile (tail/padding path)
    B2 = 20
    y0 = jax.random.normal(k0, (B2, s0 * U), dtype=jnp.float32)
    y1 = jax.random.normal(k1, (B2, s1 * U), dtype=jnp.float32)
    (out2,) = module([y0, y1], input_indices={}, output_shapes={}, output_indices={})
    out2 = jax.block_until_ready(out2)
    assert out2.shape == (B2, so * U)
    assert jnp.allclose(out2, _reference_forward(y0, y1), atol=1e-5, rtol=1e-5)

    print("KERNEL_OK")
</pallas_src>

<mosaic_0001>
module attributes {stable_mosaic.version = 11 : i64} {
  func.func @_stp_uniform1d_kernel(%arg0: i32, %arg1: memref<8x512xf32, #tpu.memory_space<vmem>>, %arg2: memref<8x384xf32, #tpu.memory_space<vmem>>, %arg3: memref<8x640xf32, #tpu.memory_space<vmem>>) attributes {dimension_semantics = [#tpu.dimension_semantics<parallel>], iteration_bounds = array<i64: 2>, scalar_prefetch = 0 : i64, scratch_operands = 0 : i64, tpu.core_type = #tpu.core_type<tc>, window_params = [{transform_indices = @transform_0, window_bounds = array<i64: 8, 512>}, {transform_indices = @transform_1, window_bounds = array<i64: 8, 384>}, {transform_indices = @transform_2, window_bounds = array<i64: 8, 640>}]} {
    %c0 = arith.constant 0 : index
    %c0_0 = arith.constant 0 : index
    %0 = vector.load %arg1[%c0, %c0_0] : memref<8x512xf32, #tpu.memory_space<vmem>>, vector<8x128xf32>
    %c0_1 = arith.constant 0 : index
    %c0_2 = arith.constant 0 : index
    %1 = vector.load %arg2[%c0_1, %c0_2] : memref<8x384xf32, #tpu.memory_space<vmem>>, vector<8x128xf32>
    %cst = arith.constant 2.000000e-01 : f32
    %2 = vector.broadcast %cst : f32 to vector<8x128xf32>
    %3 = arith.mulf %2, %1 : vector<8x128xf32>
    %4 = arith.mulf %0, %3 : vector<8x128xf32>
    %c0_3 = arith.constant 0 : index
    %c384 = arith.constant 384 : index
    %5 = vector.load %arg1[%c0_3, %c384] : memref<8x512xf32, #tpu.memory_space<vmem>>, vector<8x128xf32>
    %c0_4 = arith.constant 0 : index
    %c256 = arith.constant 256 : index
    %6 = vector.load %arg2[%c0_4, %c256] : memref<8x384xf32, #tpu.memory_space<vmem>>, vector<8x128xf32>
    %cst_5 = arith.constant -1.600000e+00 : f32
    %7 = vector.broadcast %cst_5 : f32 to vector<8x128xf32>
    %8 = arith.mulf %7, %6 : vector<8x128xf32>
    %9 = arith.mulf %5, %8 : vector<8x128xf32>
    %10 = arith.addf %4, %9 : vector<8x128xf32>
    %c0_6 = arith.constant 0 : index
    %c0_7 = arith.constant 0 : index
    %11 = vector.load %arg3[%c0_6, %c0_7] : memref<8x640xf32, #tpu.memory_space<vmem>>, vector<8x128xf32>
    tpu.vector_store %arg3[%c0_6, %c0_7], %10 {strides = array<i32>} : memref<8x640xf32, #tpu.memory_space<vmem>>, vector<8x128xf32>,
    %c0_8 = arith.constant 0 : index
    %c0_9 = arith.constant 0 : index
    %12 = vector.load %arg1[%c0_8, %c0_9] : memref<8x512xf32, #tpu.memory_space<vmem>>, vector<8x128xf32>
    %c0_10 = arith.constant 0 : index
    %c128 = arith.constant 128 : index
    %13 = vector.load %arg2[%c0_10, %c128] : memref<8x384xf32, #tpu.memory_space<vmem>>, vector<8x128xf32>
    %cst_11 = arith.constant -3.000000e-01 : f32
    %14 = vector.broadcast %cst_11 : f32 to vector<8x128xf32>
    %15 = arith.mulf %14, %13 : vector<8x128xf32>
    %16 = arith.mulf %12, %15 : vector<8x128xf32>
    %c0_12 = arith.constant 0 : index
    %c128_13 = arith.constant 128 : index
    %17 = vector.load %arg1[%c0_12, %c128_13] : memref<8x512xf32, #tpu.memory_space<vmem>>, vector<8x128xf32>
    %c0_14 = arith.constant 0 : index
    %c0_15 = arith.constant 0 : index
    %18 = vector.load %arg2[%c0_14, %c0_15] : memref<8x384xf32, #tpu.memory_space<vmem>>, vector<8x128xf32>
    %cst_16 = arith.constant -4.000000e-01 : f32
    %19 = vector.broadcast %cst_16 : f32 to vector<8x128xf32>
    %20 = arith.mulf %19, %18 : vector<8x128xf32>
    %21 = arith.mulf %17, %20 : vector<8x128xf32>
    %22 = arith.addf %16, %21 : vector<8x128xf32>
    %c0_17 = arith.constant 0 : index
    %c128_18 = arith.constant 128 : index
    %23 = vector.load %arg3[%c0_17, %c128_18] : memref<8x640xf32, #tpu.memory_space<vmem>>, vector<8x128xf32>
    tpu.vector_store %arg3[%c0_17, %c128_18], %22 {strides = array<i32>} : memref<8x640xf32, #tpu.memory_space<vmem>>, vector<8x128xf32>,
    %c0_19 = arith.constant 0 : index
    %c0_20 = arith.constant 0 : index
    %24 = vector.load %arg1[%c0_19, %c0_20] : memref<8x512xf32, #tpu.memory_space<vmem>>, vector<8x128xf32>
    %c0_21 = arith.constant 0 : index
    %c256_22 = arith.constant 256 : index
    %25 = vector.load %arg2[%c0_21, %c256_22] : memref<8x384xf32, #tpu.memory_space<vmem>>, vector<8x128xf32>
    %cst_23 = arith.constant 4.000000e-01 : f32
    %26 = vector.broadcast %cst_23 : f32 to vector<8x128xf32>
    %27 = arith.mulf %26, %25 : vector<8x128xf32>
    %28 = arith.mulf %24, %27 : vector<8x128xf32>
    %c0_24 = arith.constant 0 : index
    %c128_25 = arith.constant 128 : index
    %29 = vector.load %arg1[%c0_24, %c128_25] : memref<8x512xf32, #tpu.memory_space<vmem>>, vector<8x128xf32>
    %c0_26 = arith.constant 0 : index
    %c128_27 = arith.constant 128 : index
    %30 = vector.load %arg2[%c0_26, %c128_27] : memref<8x384xf32, #tpu.memory_space<vmem>>, vector<8x128xf32>
    %cst_28 = arith.constant 6.000000e-01 : f32
    %31 = vector.broadcast %cst_28 : f32 to vector<8x128xf32>
    %32 = arith.mulf %31, %30 : vector<8x128xf32>
    %33 = arith.mulf %29, %32 : vector<8x128xf32>
    %34 = arith.addf %28, %33 : vector<8x128xf32>
    %c0_29 = arith.constant 0 : index
    %c256_30 = arith.constant 256 : index
    %35 = vector.load %arg1[%c0_29, %c256_30] : memref<8x512xf32, #tpu.memory_space<vmem>>, vector<8x128xf32>
    %c0_31 = arith.constant 0 : index
    %c0_32 = arith.constant 0 : index
    %36 = vector.load %arg2[%c0_31, %c0_32] : memref<8x384xf32, #tpu.memory_space<vmem>>, vector<8x128xf32>
    %cst_33 = arith.constant 6.000000e-01 : f32
    %37 = vector.broadcast %cst_33 : f32 to vector<8x128xf32>
    %38 = arith.mulf %37, %36 : vector<8x128xf32>
    %39 = arith.mulf %35, %38 : vector<8x128xf32>
    %40 = arith.addf %34, %39 : vector<8x128xf32>
    %c0_34 = arith.constant 0 : index
    %c256_35 = arith.constant 256 : index
    %41 = vector.load %arg3[%c0_34, %c256_35] : memref<8x640xf32, #tpu.memory_space<vmem>>, vector<8x128xf32>
    tpu.vector_store %arg3[%c0_34, %c256_35], %40 {strides = array<i32>} : memref<8x640xf32, #tpu.memory_space<vmem>>, vector<8x128xf32>,
    %c0_36 = arith.constant 0 : index
    %c128_37 = arith.constant 128 : index
    %42 = vector.load %arg1[%c0_36, %c128_37] : memref<8x512xf32, #tpu.memory_space<vmem>>, vector<8x128xf32>
    %c0_38 = arith.constant 0 : index
    %c256_39 = arith.constant 256 : index
    %43 = vector.load %arg2[%c0_38, %c256_39] : memref<8x384xf32, #tpu.memory_space<vmem>>, vector<8x128xf32>
    %cst_40 = arith.constant -8.000000e-01 : f32
    %44 = vector.broadcast %cst_40 : f32 to vector<8x128xf32>
    %45 = arith.mulf %44, %43 : vector<8x128xf32>
    %46 = arith.mulf %42, %45 : vector<8x128xf32>
    %c0_41 = arith.constant 0 : index
    %c256_42 = arith.constant 256 : index
    %47 = vector.load %arg1[%c0_41, %c256_42] : memref<8x512xf32, #tpu.memory_space<vmem>>, vector<8x128xf32>
    %c0_43 = arith.constant 0 : index
    %c128_44 = arith.constant 128 : index
    %48 = vector.load %arg2[%c0_43, %c128_44] : memref<8x384xf32, #tpu.memory_space<vmem>>, vector<8x128xf32>
    %cst_45 = arith.constant -0.899999976 : f32
    %49 = vector.broadcast %cst_45 : f32 to vector<8x128xf32>
    %50 = arith.mulf %49, %48 : vector<8x128xf32>
    %51 = arith.mulf %47, %50 : vector<8x128xf32>
    %52 = arith.addf %46, %51 : vector<8x128xf32>
    %c0_46 = arith.constant 0 : index
    %c384_47 = arith.constant 384 : index
    %53 = vector.load %arg1[%c0_46, %c384_47] : memref<8x512xf32, #tpu.memory_space<vmem>>, vector<8x128xf32>
    %c0_48 = arith.constant 0 : index
    %c0_49 = arith.constant 0 : index
    %54 = vector.load %arg2[%c0_48, %c0_49] : memref<8x384xf32, #tpu.memory_space<vmem>>, vector<8x128xf32>
    %cst_50 = arith.constant -8.000000e-01 : f32
    %55 = vector.broadcast %cst_50 : f32 to vector<8x128xf32>
    %56 = arith.mulf %55, %54 : vector<8x128xf32>
    %57 = arith.mulf %53, %56 : vector<8x128xf32>
    %58 = arith.addf %52, %57 : vector<8x128xf32>
    %c0_51 = arith.constant 0 : index
    %c384_52 = arith.constant 384 : index
    %59 = vector.load %arg3[%c0_51, %c384_52] : memref<8x640xf32, #tpu.memory_space<vmem>>, vector<8x128xf32>
    tpu.vector_store %arg3[%c0_51, %c384_52], %58 {strides = array<i32>} : memref<8x640xf32, #tpu.memory_space<vmem>>, vector<8x128xf32>,
    %c0_53 = arith.constant 0 : index
    %c256_54 = arith.constant 256 : index
    %60 = vector.load %arg1[%c0_53, %c256_54] : memref<8x512xf32, #tpu.memory_space<vmem>>, vector<8x128xf32>
    %c0_55 = arith.constant 0 : index
    %c256_56 = arith.constant 256 : index
    %61 = vector.load %arg2[%c0_55, %c256_56] : memref<8x384xf32, #tpu.memory_space<vmem>>, vector<8x128xf32>
    %cst_57 = arith.constant 1.200000e+00 : f32
    %62 = vector.broadcast %cst_57 : f32 to vector<8x128xf32>
    %63 = arith.mulf %62, %61 : vector<8x128xf32>
    %64 = arith.mulf %60, %63 : vector<8x128xf32>
    %c0_58 = arith.constant 0 : index
    %c384_59 = arith.constant 384 : index
    %65 = vector.load %arg1[%c0_58, %c384_59] : memref<8x512xf32, #tpu.memory_space<vmem>>, vector<8x128xf32>
    %c0_60 = arith.constant 0 : index
    %c128_61 = arith.constant 128 : index
    %66 = vector.load %arg2[%c0_60, %c128_61] : memref<8x384xf32, #tpu.memory_space<vmem>>, vector<8x128xf32>
    %cst_62 = arith.constant 1.200000e+00 : f32
    %67 = vector.broadcast %cst_62 : f32 to vector<8x128xf32>
    %68 = arith.mulf %67, %66 : vector<8x128xf32>
    %69 = arith.mulf %65, %68 : vector<8x128xf32>
    %70 = arith.addf %64, %69 : vector<8x128xf32>
    %c0_63 = arith.constant 0 : index
    %c512 = arith.constant 512 : index
    %71 = vector.load %arg3[%c0_63, %c512] : memref<8x640xf32, #tpu.memory_space<vmem>>, vector<8x128xf32>
    tpu.vector_store %arg3[%c0_63, %c512], %70 {strides = array<i32>} : memref<8x640xf32, #tpu.memory_space<vmem>>, vector<8x128xf32>,
    return
  }
  func.func @transform_0(%arg0: i32) -> (i32, i32) {
    %c0_i32 = arith.constant 0 : i32
    %c0_i32_0 = arith.constant 0 : i32
    return %arg0, %c0_i32 : i32, i32
  }
  func.func @transform_1(%arg0: i32) -> (i32, i32) {
    %c0_i32 = arith.constant 0 : i32
    %c0_i32_0 = arith.constant 0 : i32
    return %arg0, %c0_i32 : i32, i32
  }
  func.func @transform_2(%arg0: i32) -> (i32, i32) {
    %c0_i32 = arith.constant 0 : i32
    %c0_i32_0 = arith.constant 0 : i32
    return %arg0, %c0_i32 : i32, i32
  }
}

</mosaic_0001>

<llo_original>
// kernel: tpu_custom_call.1
$region0: #{tpu_custom_call.1}
  #allocation0 [shape = 'u32[]', space=smem, size = 0x4, offset = 0x4, fixed_abs, tag = 'smem constant byte address 0x4 - core index']
  #allocation1 [shape = 'u32[144,128]{1,0:T(1,128)}', space=vmem, size = 0x12000, scoped, tag = 'internal scratch']
  %s0 = inlined_call_operand.hbm [shape: f32[16,512], index: 0, kind: input, shape index: {}]
  %s1 = inlined_call_operand.hbm [shape: f32[16,384], index: 1, kind: input, shape index: {}]
  %s2 = inlined_call_operand.hbm [shape: f32[16,640], index: 2, kind: output, shape index: {}]
  %s3 = sld [smem:[#allocation0]]
  $region49: #{tpu_custom_call.1} parent=0
    _
  %s5 = ssub.s32 1, %s3
  %s6 = scalar_select 0, %s5, %s3
  $region1: #{tpu_custom_call.1} parent=0
    #allocation2 [shape = 'u8[32768]{0}', space=vmem, size = 0x8000, scoped, tag = 'input window, operand 0']
    #allocation3 [shape = 's32[2]{0}', space=sflag, size = 0x8, scoped, tag = 'scoped memory for tpu_custom_call.1']
    #allocation4 [shape = 's32[2]{0}', space=sflag, size = 0x8, scoped, tag = 'scoped memory for tpu_custom_call.1']
    #allocation5 [shape = 'u8[24576]{0}', space=vmem, size = 0x6000, scoped, tag = 'input window, operand 1']
    #allocation6 [shape = 's32[2]{0}', space=sflag, size = 0x8, scoped, tag = 'scoped memory for tpu_custom_call.1']
    #allocation7 [shape = 'u8[40960]{0}', space=vmem, size = 0xa000, scoped, tag = 'output window, operand 0']
    %7 = vsyncpa [#allocation3], 0
    %s8 = scalar_lea.sflag [#allocation3], 1
    %9 = vsyncpa %s8, 0
    %10 = vsyncpa [#allocation6], 0
    %s11 = scalar_lea.sflag [#allocation6], 1
    %12 = vsyncpa %s11, 0
    %13 = vsyncpa [#allocation4], 0
    %s14 = scalar_lea.sflag [#allocation4], 1
    %15 = vsyncpa %s14, 0
    loop: start=0, step=1, limit=4
    $region2: #{tpu_custom_call.1} parent=1 // loop_pre_header
      _
    $region3: #{tpu_custom_call.1} parent=1 // loop_header
      %s17 = sphi 0, %s21
      %p18 = scmp.ge.s32.totalorder %s17, 4
      %s27 = sphi 0, %s29
      %s30 = sphi 0, %s27
      %s31 = sphi 0, %s30
      %s47 = sphi 0, %s31
      %s53 = sphi 0, %s55
      %s56 = sphi 0, %s53
      %s57 = sphi 0, %s56
      %s73 = sphi 0, %s57
      %s79 = sphi 0, %s81
      %s82 = sphi 0, %s79
      %s83 = sphi 0, %s82
      %s99 = sphi 0, %s83
    $region4: #{tpu_custom_call.1} parent=1 // loop_header_branch
      %20 = sbr.rel (%p18) target = $region8
    $region5: #{tpu_custom_call.1} parent=1 // loop_body
      %s22 = ssub.s32 %s17, 1
      %s23 = ssub.s32 %s17, 2
      %s24 = sadd.s32 %s17, 1
      %s25 = ssub.s32 %s17, %s24
      %p26 = scmp.eq.s32.totalorder %s25, 0
      %s28 = sadd.s32 %s27, 1
      %s29 = scalar_select %p26, %s27, %s28
      %p32 = pneg %p26
      %p33 = scmp.eq.s32.totalorder %s17, 1
      %p34 = por %p32, %p33
      %p35 = scmp.ne.s32.totalorder %s27, %s30
      %p36 = scmp.eq.s32.totalorder %s17, 0
      %p37 = por %p35, %p36
      %p38 = scmp.ne.s32.totalorder %s27, %s30
      %p39 = scmp.eq.s32.totalorder %s22, 1
      %p40 = por %p38, %p39
      %p41 = scmp.ne.s32.totalorder %s30, %s31
      %p42 = scmp.eq.s32.totalorder %s22, 0
      %p43 = por %p41, %p42
      %p44 = scmp.ne.s32.totalorder %s30, %s31
      %p45 = scmp.eq.s32.totalorder %s23, 1
      %p46 = por %p44, %p45
      %p48 = scmp.ne.s32.totalorder %s31, %s47
      %p49 = scmp.eq.s32.totalorder %s23, 0
      %p50 = por %p48, %p49
      %s51 = ssub.s32 %s17, %s24
      %p52 = scmp.eq.s32.totalorder %s51, 0
      %s54 = sadd.s32 %s53, 1
      %s55 = scalar_select %p52, %s53, %s54
      %p58 = pneg %p52
      %p59 = scmp.eq.s32.totalorder %s17, 1
      %p60 = por %p58, %p59
      %p61 = scmp.ne.s32.totalorder %s53, %s56
      %p62 = scmp.eq.s32.totalorder %s17, 0
      %p63 = por %p61, %p62
      %p64 = scmp.ne.s32.totalorder %s53, %s56
      %p65 = scmp.eq.s32.totalorder %s22, 1
      %p66 = por %p64, %p65
      %p67 = scmp.ne.s32.totalorder %s56, %s57
      %p68 = scmp.eq.s32.totalorder %s22, 0
      %p69 = por %p67, %p68
      %p70 = scmp.ne.s32.totalorder %s56, %s57
      %p71 = scmp.eq.s32.totalorder %s23, 1
      %p72 = por %p70, %p71
      %p74 = scmp.ne.s32.totalorder %s57, %s73
      %p75 = scmp.eq.s32.totalorder %s23, 0
      %p76 = por %p74, %p75
      %s77 = ssub.s32 %s17, %s24
      %p78 = scmp.eq.s32.totalorder %s77, 0
      %s80 = sadd.s32 %s79, 1
      %s81 = scalar_select %p78, %s79, %s80
      %p84 = pneg %p78
      %p85 = scmp.eq.s32.totalorder %s17, 1
      %p86 = por %p84, %p85
      %p87 = scmp.ne.s32.totalorder %s79, %s82
      %p88 = scmp.eq.s32.totalorder %s17, 0
      %p89 = por %p87, %p88
      %p90 = scmp.ne.s32.totalorder %s79, %s82
      %p91 = scmp.eq.s32.totalorder %s22, 1
      %p92 = por %p90, %p91
      %p93 = scmp.ne.s32.totalorder %s82, %s83
      %p94 = scmp.eq.s32.totalorder %s22, 0
      %p95 = por %p93, %p94
      %p96 = scmp.ne.s32.totalorder %s82, %s83
      %p97 = scmp.eq.s32.totalorder %s23, 1
      %p98 = por %p96, %p97
      %p100 = scmp.ne.s32.totalorder %s83, %s99
      %p101 = scmp.eq.s32.totalorder %s23, 0
      %p102 = por %p100, %p101
      %p103 = scmp.le.s32.totalorder 1, %s17
      %p104 = scmp.lt.s32.totalorder %s17, 3
      %p105 = pnand %p103, %p104
      %p106 = pneg %p105
      // Predicated region
      $region9: #{tpu_custom_call.1} parent=5 // pred_check
        _
      $region10: #{tpu_custom_call.1} parent=5 // pred_check_branch
        %108 = sbr.rel (%p105) target = $region12
      $region11: #{tpu_custom_call.1} parent=5 // pred_region
        %s109 = ssub.s32 %s17, 1
      $region12: #{tpu_custom_call.1} parent=5 // pred_fallthru
        _
      %p110 = scmp.lt.s32.totalorder %s17, 2
      // Predicated region
      $region13: #{tpu_custom_call.1} parent=5 // pred_check
        %p111 = pneg %p110
      $region14: #{tpu_custom_call.1} parent=5 // pred_check_branch
        %113 = sbr.rel (%p111) target = $region16
      $region15: #{tpu_custom_call.1} parent=5 // pred_region
        // Predicated region
        $region17: #{tpu_custom_call.1} parent=15 // pred_check
          %p114 = pneg %p37
        $region18: #{tpu_custom_call.1} parent=15 // pred_check_branch
          %116 = sbr.rel (%p114) target = $region20
        $region19: #{tpu_custom_call.1} parent=15 // pred_region
          %s117 = sand.u32 %s27, 1
          %s118 = scalar_lea.sflag [#allocation3], %s117
          %s119 = sand.u32 %s27, 1
          %s120 = smul.addr %s119, 32
          %s121 = scalar_lea.vmem [#allocation2], %s120
          %s123 = ssub.s32 512, 512
          %124 = vsyncadd %s118, %s123
          %s125 = smul.addr %s17, 4
          %s126 = smul.addr %s125, 128
          %s127 = scalar_lea.hbm %s0, %s126
          %s129 = sshll.u32 %s121, 4
          %s130 = int_to_ptr.vmem [resolvable:$true] %s129
          %132 = dma.hbm_to_vmem [thread:$0]  %s127, 512, %s130, %s118
        $region20: #{tpu_custom_call.1} parent=15 // pred_fallthru
          _
        // Predicated region
        $region21: #{tpu_custom_call.1} parent=15 // pred_check
          %p133 = pneg %p63
        $region22: #{tpu_custom_call.1} parent=15 // pred_check_branch
          %135 = sbr.rel (%p133) target = $region24
        $region23: #{tpu_custom_call.1} parent=15 // pred_region
          %s136 = sand.u32 %s53, 1
          %s137 = scalar_lea.sflag [#allocation6], %s136
          %s138 = sand.u32 %s53, 1
          %s139 = smul.addr %s138, 24
          %s140 = scalar_lea.vmem [#allocation5], %s139
          %s142 = ssub.s32 384, 384
          %143 = vsyncadd %s137, %s142
          %s144 = smul.addr %s17, 3
          %s145 = smul.addr %s144, 128
          %s146 = scalar_lea.hbm %s1, %s145
          %s148 = sshll.u32 %s140, 4
          %s149 = int_to_ptr.vmem [resolvable:$true] %s148
          %151 = dma.hbm_to_vmem [thread:$0]  %s146, 384, %s149, %s137
        $region24: #{tpu_custom_call.1} parent=15 // pred_fallthru
          _
      $region16: #{tpu_custom_call.1} parent=5 // pred_fallthru
        _
      %p152 = scmp.le.s32.totalorder 1, %s17
      %p153 = scmp.lt.s32.totalorder %s17, 3
      %p154 = pnand %p152, %p153
      %p155 = pneg %p154
      // Predicated region
      $region25: #{tpu_custom_call.1} parent=5 // pred_check
        _
      $region26: #{tpu_custom_call.1} parent=5 // pred_check_branch
        %157 = sbr.rel (%p154) target = $region28
      $region27: #{tpu_custom_call.1} parent=5 // pred_region
        %s158 = ssub.s32 %s17, 1
        %s159 = sand.u32 %s30, 1
        %s160 = scalar_lea.sflag [#allocation3], %s159
        %s161 = sand.u32 %s30, 1
        %s162 = smul.addr %s161, 32
        %s163 = scalar_lea.vmem [#allocation2], %s162
        // Predicated region
        $region29: #{tpu_custom_call.1} parent=27 // pred_check
          %p164 = pneg %p43
        $region30: #{tpu_custom_call.1} parent=27 // pred_check_branch
          %166 = sbr.rel (%p164) target = $region32
        $region31: #{tpu_custom_call.1} parent=27 // pred_region
          %167 = dma.done %s160, 512
        $region32: #{tpu_custom_call.1} parent=27 // pred_fallthru
          _
        %s168 = sand.u32 %s56, 1
        %s169 = scalar_lea.sflag [#allocation6], %s168
        %s170 = sand.u32 %s56, 1
        %s171 = smul.addr %s170, 24
        %s172 = scalar_lea.vmem [#allocation5], %s171
        // Predicated region
        $region33: #{tpu_custom_call.1} parent=27 // pred_check
          %p173 = pneg %p69
        $region34: #{tpu_custom_call.1} parent=27 // pred_check_branch
          %175 = sbr.rel (%p173) target = $region36
        $region35: #{tpu_custom_call.1} parent=27 // pred_region
          %176 = dma.done %s169, 384
        $region36: #{tpu_custom_call.1} parent=27 // pred_fallthru
          _
        %s177 = sand.u32 %s30, 1
        %s178 = scalar_lea.sflag [#allocation3], %s177
        %s179 = sand.u32 %s30, 1
        %s180 = smul.addr %s179, 32
        %s181 = scalar_lea.vmem [#allocation2], %s180
        %p182 = pneg %p43
        %p183 = pneg %p40
        %s184 = sand.u32 %s56, 1
        %s185 = scalar_lea.sflag [#allocation6], %s184
        %s186 = sand.u32 %s56, 1
        %s187 = smul.addr %s186, 24
        %s188 = scalar_lea.vmem [#allocation5], %s187
        %p189 = pneg %p69
        %p190 = pneg %p66
        %p191 = pneg %p95
        %p192 = pneg %p92
        %s193 = sand.u32 %s82, 1
        %s194 = scalar_lea.sflag [#allocation4], %s193
        %s195 = sand.u32 %s82, 1
        %s196 = smul.addr %s195, 40
        %s197 = scalar_lea.vmem [#allocation7], %s196
        %v198 = vld [vmem:[%s163] sm:$0xff]
        %v199 = vld [vmem:[%s172] sm:$0xff]
        %v200 = vmul.f32 %v199, 0.2
        %v201 = vmul.f32 %v198, %v200
        %v202 = vld [vmem:[%s163 + $0x18] sm:$0xff]
        %v203 = vld [vmem:[%s172 + $0x10] sm:$0xff]
        %v204 = vmul.f32 %v203, -1.6
        %v205 = vmul.f32 %v202, %v204
        %v206 = vadd.f32 %v201, %v205
        %207 = vst [vmem:[%s197] sm:$0xff] %v206
        %v208 = vld [vmem:[%s163] sm:$0xff]
        %v209 = vld [vmem:[%s172 + $0x8] sm:$0xff]
        %v210 = vmul.f32 %v209, -0.3
        %v211 = vmul.f32 %v208, %v210
        %v212 = vld [vmem:[%s163 + $0x8] sm:$0xff]
        %v213 = vld [vmem:[%s172] sm:$0xff]
        %v214 = vmul.f32 %v213, -0.4
        %v215 = vmul.f32 %v212, %v214
        %v216 = vadd.f32 %v211, %v215
        %217 = vst [vmem:[%s197 + $0x8] sm:$0xff] %v216
        %v218 = vld [vmem:[%s163] sm:$0xff]
        %v219 = vld [vmem:[%s172 + $0x10] sm:$0xff]
        %v220 = vmul.f32 %v219, 0.4
        %v221 = vmul.f32 %v218, %v220
        %v222 = vld [vmem:[%s163 + $0x8] sm:$0xff]
        %v223 = vld [vmem:[%s172 + $0x8] sm:$0xff]
        %v224 = vmul.f32 %v223, 0.6
        %v225 = vmul.f32 %v222, %v224
        %v226 = vadd.f32 %v221, %v225
        %v227 = vld [vmem:[%s163 + $0x10] sm:$0xff]
        %v228 = vld [vmem:[%s172] sm:$0xff]
        %v229 = vmul.f32 %v228, 0.6
        %v230 = vmul.f32 %v227, %v229
        %v231 = vadd.f32 %v226, %v230
        %232 = vst [vmem:[%s197 + $0x10] sm:$0xff] %v231
        %v233 = vld [vmem:[%s163 + $0x8] sm:$0xff]
        %v234 = vld [vmem:[%s172 + $0x10] sm:$0xff]
        %v235 = vmul.f32 %v234, -0.8
        %v236 = vmul.f32 %v233, %v235
        %v237 = vld [vmem:[%s163 + $0x10] sm:$0xff]
        %v238 = vld [vmem:[%s172 + $0x8] sm:$0xff]
        %v239 = vmul.f32 %v238, -0.9
        %v240 = vmul.f32 %v237, %v239
        %v241 = vadd.f32 %v236, %v240
        %v242 = vld [vmem:[%s163 + $0x18] sm:$0xff]
        %v243 = vld [vmem:[%s172] sm:$0xff]
        %v244 = vmul.f32 %v243, -0.8
        %v245 = vmul.f32 %v242, %v244
        %v246 = vadd.f32 %v241, %v245
        %247 = vst [vmem:[%s197 + $0x18] sm:$0xff] %v246
        %v248 = vld [vmem:[%s163 + $0x10] sm:$0xff]
        %v249 = vld [vmem:[%s172 + $0x10] sm:$0xff]
        %v250 = vmul.f32 %v249, 1.2
        %v251 = vmul.f32 %v248, %v250
        %v252 = vld [vmem:[%s163 + $0x18] sm:$0xff]
        %v253 = vld [vmem:[%s172 + $0x8] sm:$0xff]
        %v254 = vmul.f32 %v253, 1.2
        %v255 = vmul.f32 %v252, %v254
        %v256 = vadd.f32 %v251, %v255
        %257 = vst [vmem:[%s197 + $0x20] sm:$0xff] %v256
        %s258 = sand.u32 %s82, 1
        %s259 = scalar_lea.sflag [#allocation4], %s258
        %s260 = sand.u32 %s82, 1
        %s261 = smul.addr %s260, 40
        %s262 = scalar_lea.vmem [#allocation7], %s261
        // Predicated region
        $region37: #{tpu_custom_call.1} parent=27 // pred_check
          %p263 = pneg %p92
        $region38: #{tpu_custom_call.1} parent=27 // pred_check_branch
          %265 = sbr.rel (%p263) target = $region40
        $region39: #{tpu_custom_call.1} parent=27 // pred_region
          %s267 = ssub.s32 640, 640
          %268 = vsyncadd %s259, %s267
          %s269 = smul.addr %s22, 5
          %s270 = smul.addr %s269, 128
          %s271 = scalar_lea.hbm %s2, %s270
          %s273 = sshll.u32 %s262, 4
          %s274 = int_to_ptr.vmem [resolvable:$true] %s273
          %276 = dma.vmem_to_hbm [thread:$0]  %s274, 640, %s271, %s259
        $region40: #{tpu_custom_call.1} parent=27 // pred_fallthru
          _
      $region28: #{tpu_custom_call.1} parent=5 // pred_fallthru
        _
      %p277 = scmp.le.s32.totalorder 2, %s17
      // Predicated region
      $region41: #{tpu_custom_call.1} parent=5 // pred_check
        %p278 = pneg %p277
      $region42: #{tpu_custom_call.1} parent=5 // pred_check_branch
        %280 = sbr.rel (%p278) target = $region44
      $region43: #{tpu_custom_call.1} parent=5 // pred_region
        %s281 = ssub.s32 %s17, 2
        // Predicated region
        $region45: #{tpu_custom_call.1} parent=43 // pred_check
          %p282 = pneg %p98
        $region46: #{tpu_custom_call.1} parent=43 // pred_check_branch
          %284 = sbr.rel (%p282) target = $region48
        $region47: #{tpu_custom_call.1} parent=43 // pred_region
          %s285 = sand.u32 %s83, 1
          %s286 = scalar_lea.sflag [#allocation4], %s285
          %s287 = sand.u32 %s83, 1
          %s288 = smul.addr %s287, 40
          %s289 = scalar_lea.vmem [#allocation7], %s288
          %290 = dma.done %s286, 640
        $region48: #{tpu_custom_call.1} parent=43 // pred_fallthru
          _
      $region44: #{tpu_custom_call.1} parent=5 // pred_fallthru
        _
    $region6: #{tpu_custom_call.1} parent=1 // loop_footer
      %s21 = sadd.s32 1, %s17
    $region7: #{tpu_custom_call.1} parent=1 // loop_footer_branch
      %16 = sbr.rel target = $region3
    $region8: #{tpu_custom_call.1} parent=1 // loop_exit
      _
    %291 = vsyncpa [#allocation3], 1
    %s292 = scalar_lea.sflag [#allocation3], 1
    %293 = vsyncpa %s292, 1
    %294 = vsyncpa [#allocation6], 1
    %s295 = scalar_lea.sflag [#allocation6], 1
    %296 = vsyncpa %s295, 1
    %297 = vsyncpa [#allocation4], 1
    %s298 = scalar_lea.sflag [#allocation4], 1
    %299 = vsyncpa %s298, 1

</llo_original>
